<compile_context>
chip_gen: v5e
topology: v5e:2x2
jax: 0.10.0
libtpu: 0.0.40
codegen_flags: <defaults>
</compile_context>

<pallas_src>
import functools

import jax
import jax.numpy as jnp
from jax.experimental import pallas as pl
from jax.experimental.pallas import tpu as pltpu

_P = 128  # lane-aligned padded feature width (all layer widths here are <= 128)


def _round_up(x, m):
    return ((x + m - 1) // m) * m


def _cdiv(a, b):
    return -(-a // b)


def _mlp_kernel(x_ref, w_ref, b_ref, out_ref, *, in_size):
    # x_ref:   [TB, in_size]  activations at true width (f32)
    # w_ref:   [5, P, P]      zero-padded weights in bf16, layer i at w_ref[i] (resident)
    # b_ref:   [5, 1, P]      zero-padded biases (f32)
    # out_ref: [TB, P]        lane-dense f32 output slab
    h = x_ref[...]                                  # f32 [TB, in_size]
    w0 = w_ref[0][:in_size, :]                      # static slice of resident tile (bf16)
    # Layer 1: Linear + ReLU (bf16 MXU inputs, f32 accumulate / bias / ReLU).
    h = jnp.maximum(
        jnp.dot(h.astype(jnp.bfloat16), w0, preferred_element_type=jnp.float32)
        + b_ref[0], 0.0)
    # Layers 2-4: Linear + ReLU on the zero-padded 128-wide slab (padded lanes stay 0).
    for i in range(1, 4):
        h = jnp.maximum(
            jnp.dot(h.astype(jnp.bfloat16), w_ref[i], preferred_element_type=jnp.float32)
            + b_ref[i], 0.0)
    # Layer 5: Linear only.
    out_ref[...] = (
        jnp.dot(h.astype(jnp.bfloat16), w_ref[4], preferred_element_type=jnp.float32)
        + b_ref[4])


def pack_params(params, p=_P):
    """Pack 5 (W [in,out], b [1,out]) pairs into zero-padded slabs (done once, off hot path).

    Weights are stored in bf16 (MXU-native on all gens); biases stay f32 for the f32
    bias-add / ReLU path.
    """
    n = len(params)
    w_slab = jnp.zeros((n, p, p), jnp.float32)
    b_slab = jnp.zeros((n, 1, p), jnp.float32)
    for i, (w, b) in enumerate(params):
        w_slab = w_slab.at[i, : w.shape[0], : w.shape[1]].set(w)
        b_slab = b_slab.at[i, 0, : b.shape[1]].set(b.reshape(-1))
    return w_slab.astype(jnp.bfloat16), b_slab


def _choose_tiling(batch, cap=512):
    """Row tiling: big tiles (>=85% of HBM roofline), minimal over-pad, even tile count
    when large so v7x's 2 TensorCores both get work."""
    pb8 = _round_up(max(batch, 1), 8)
    if pb8 <= cap:
        if pb8 >= 2 * 256:                    # big enough to split across 2 TCs
            n_tiles = 2
            tb = _round_up(_cdiv(pb8, 2), 8)
        else:                                 # toy/small: single grid step, zero overhead
            n_tiles, tb = 1, pb8
    else:
        n_tiles = _cdiv(pb8, cap)
        if n_tiles % 2:                       # even tile count for v7x sharding
            n_tiles += 1
        tb = _round_up(_cdiv(pb8, n_tiles), 8)
    return tb, n_tiles, tb * n_tiles


@functools.partial(jax.jit, static_argnames=("in_size", "out_size"))
def five_layer_nn(x, w_slab, b_slab, *, in_size, out_size):
    batch = x.shape[0]
    p = w_slab.shape[-1]

    tb, n_tiles, padded_batch = _choose_tiling(batch)

    # Only copy x when the batch needs row padding (no 128-wide padded slab in HBM).
    if padded_batch != batch:
        x_in = jnp.zeros((padded_batch, in_size), x.dtype).at[:batch].set(x)
    else:
        x_in = x

    # Advisory cost + explicit VMEM budget (resident bf16 weights + double-buffered tiles).
    flops = 2 * padded_batch * (in_size * p + 4 * p * p)
    w_bytes = w_slab.size * w_slab.dtype.itemsize
    b_bytes = b_slab.size * b_slab.dtype.itemsize
    x_bytes = x_in.size * x_in.dtype.itemsize
    out_bytes = padded_batch * p * 4
    cost = pl.CostEstimate(flops=flops, transcendentals=0,
                           bytes_accessed=x_bytes + w_bytes + b_bytes + out_bytes)
    tile_bytes = tb * (in_size + p) * 4
    vmem_limit = max(32 * 1024 * 1024,
                     min(64 * 1024 * 1024,
                         2 * (w_bytes + b_bytes + tile_bytes) + (8 << 20)))

    kernel = functools.partial(_mlp_kernel, in_size=in_size)
    out_pad = pl.pallas_call(
        kernel,
        out_shape=jax.ShapeDtypeStruct((padded_batch, p), jnp.float32),
        grid=(n_tiles,),
        in_specs=[
            pl.BlockSpec((tb, in_size), lambda i: (i, 0)),        # x: streamed per row tile
            pl.BlockSpec(w_slab.shape, lambda i: (0, 0, 0)),      # weights: resident (bf16)
            pl.BlockSpec(b_slab.shape, lambda i: (0, 0, 0)),      # biases: resident (f32)
        ],
        out_specs=pl.BlockSpec((tb, p), lambda i: (i, 0)),        # lane-dense output slab
        compiler_params=pltpu.CompilerParams(
            dimension_semantics=("parallel",),                    # 2-TC shard on v7x
            vmem_limit_bytes=vmem_limit),
        cost_estimate=cost,
    )(x_in, w_slab, b_slab)

    return out_pad[:batch, :out_size]


def init_params(key, input_size, hidden_size, output_size):
    """Deterministic init mirroring nn.Linear default (uniform +/- 1/sqrt(fan_in))."""
    dims = [input_size,
            hidden_size,
            hidden_size // 2,
            hidden_size // 4,
            hidden_size // 8,
            output_size]
    params = []
    for i in range(5):
        fan_in, fan_out = dims[i], dims[i + 1]
        key, kw, kb = jax.random.split(key, 3)
        bound = 1.0 / jnp.sqrt(fan_in)
        w = jax.random.uniform(kw, (fan_in, fan_out), jnp.float32, -bound, bound)
        b = jax.random.uniform(kb, (1, fan_out), jnp.float32, -bound, bound)
        params.append((w, b))
    return params


def reference(x, params):
    h = x
    for i, (w, b) in enumerate(params):
        h = h @ w + b
        if i < 4:
            h = jnp.maximum(h, 0.0)
    return h


if __name__ == "__main__":
    input_size, hidden_size, output_size = 32, 64, 4
    batch = 8

    key = jax.random.PRNGKey(0)
    key, kx = jax.random.split(key)
    x = jax.random.normal(kx, (batch, input_size), jnp.float32)
    params = init_params(key, input_size, hidden_size, output_size)
    w_slab, b_slab = pack_params(params)

    out = five_layer_nn(x, w_slab, b_slab, in_size=input_size, out_size=output_size)
    jax.block_until_ready(out)

    ref = reference(x, params)
    assert out.shape == (batch, output_size)
    # bf16 weights/activations at the MXU (f32 accumulate) => loosened tolerance vs f32 ref.
    max_err = float(jnp.max(jnp.abs(out - ref)))
    assert jnp.allclose(out, ref, atol=2e-2, rtol=2e-2), max_err

    print("KERNEL_OK")
</pallas_src>

<mosaic_0001>
module attributes {stable_mosaic.version = 11 : i64} {
  func.func @_mlp_kernel(%arg0: i32, %arg1: memref<8x32xf32, #tpu.memory_space<vmem>>, %arg2: memref<5x128x128xbf16, #tpu.memory_space<vmem>>, %arg3: memref<5x1x128xf32, #tpu.memory_space<vmem>>, %arg4: memref<8x128xf32, #tpu.memory_space<vmem>>) attributes {dimension_semantics = [#tpu.dimension_semantics<parallel>], iteration_bounds = array<i64: 1>, scalar_prefetch = 0 : i64, scratch_operands = 0 : i64, tpu.core_type = #tpu.core_type<tc>, window_params = [{transform_indices = @transform_0, window_bounds = array<i64: 8, 32>}, {pipeline_mode = #tpu.pipeline_mode<synchronous>, transform_indices = @transform_1, window_bounds = array<i64: 5, 128, 128>}, {pipeline_mode = #tpu.pipeline_mode<synchronous>, transform_indices = @transform_2, window_bounds = array<i64: 5, 1, 128>}, {transform_indices = @transform_3, window_bounds = array<i64: 8, 128>}]} {
    %c0 = arith.constant 0 : index
    %c0_0 = arith.constant 0 : index
    %0 = vector.load %arg1[%c0, %c0_0] : memref<8x32xf32, #tpu.memory_space<vmem>>, vector<8x32xf32>
    %c0_1 = arith.constant 0 : index
    %c0_2 = arith.constant 0 : index
    %c0_3 = arith.constant 0 : index
    %1 = vector.load %arg2[%c0_1, %c0_2, %c0_3] : memref<5x128x128xbf16, #tpu.memory_space<vmem>>, vector<1x128x128xbf16>
    %2 = vector.shape_cast %1 : vector<1x128x128xbf16> to vector<128x128xbf16>
    %3 = vector.extract_strided_slice %2 {offsets = [0, 0], sizes = [32, 128], strides = [1, 1]} : vector<128x128xbf16> to vector<32x128xbf16>
    %4 = arith.truncf %0 : vector<8x32xf32> to vector<8x32xbf16>
    %cst = arith.constant dense<0.000000e+00> : vector<8x128xf32>
    %5 = tpu.matmul %4, %3, %cst {dimension_numbers = #tpu.dot_dimension_numbers<[1], [0], [0], [1], [0, 0, 1, 1], [], []>} : vector<8x32xbf16>, vector<32x128xbf16>, vector<8x128xf32> -> vector<8x128xf32>
    %c0_4 = arith.constant 0 : index
    %c0_5 = arith.constant 0 : index
    %c0_6 = arith.constant 0 : index
    %6 = vector.load %arg3[%c0_4, %c0_5, %c0_6] : memref<5x1x128xf32, #tpu.memory_space<vmem>>, vector<1x1x128xf32>
    %7 = vector.shape_cast %6 : vector<1x1x128xf32> to vector<1x128xf32>
    %8 = vector.broadcast %7 : vector<1x128xf32> to vector<8x128xf32>
    %9 = arith.addf %5, %8 : vector<8x128xf32>
    %cst_7 = arith.constant 0.000000e+00 : f32
    %10 = vector.broadcast %cst_7 : f32 to vector<8x128xf32>
    %11 = arith.maximumf %9, %10 : vector<8x128xf32>
    %12 = arith.truncf %11 : vector<8x128xf32> to vector<8x128xbf16>
    %c1 = arith.constant 1 : index
    %c0_8 = arith.constant 0 : index
    %c0_9 = arith.constant 0 : index
    %13 = vector.load %arg2[%c1, %c0_8, %c0_9] : memref<5x128x128xbf16, #tpu.memory_space<vmem>>, vector<1x128x128xbf16>
    %14 = vector.shape_cast %13 : vector<1x128x128xbf16> to vector<128x128xbf16>
    %cst_10 = arith.constant dense<0.000000e+00> : vector<8x128xf32>
    %15 = tpu.matmul %12, %14, %cst_10 {dimension_numbers = #tpu.dot_dimension_numbers<[1], [0], [0], [1], [0, 0, 1, 1], [], []>} : vector<8x128xbf16>, vector<128x128xbf16>, vector<8x128xf32> -> vector<8x128xf32>
    %c1_11 = arith.constant 1 : index
    %c0_12 = arith.constant 0 : index
    %c0_13 = arith.constant 0 : index
    %16 = vector.load %arg3[%c1_11, %c0_12, %c0_13] : memref<5x1x128xf32, #tpu.memory_space<vmem>>, vector<1x1x128xf32>
    %17 = vector.shape_cast %16 : vector<1x1x128xf32> to vector<1x128xf32>
    %18 = vector.broadcast %17 : vector<1x128xf32> to vector<8x128xf32>
    %19 = arith.addf %15, %18 : vector<8x128xf32>
    %cst_14 = arith.constant 0.000000e+00 : f32
    %20 = vector.broadcast %cst_14 : f32 to vector<8x128xf32>
    %21 = arith.maximumf %19, %20 : vector<8x128xf32>
    %22 = arith.truncf %21 : vector<8x128xf32> to vector<8x128xbf16>
    %c2 = arith.constant 2 : index
    %c0_15 = arith.constant 0 : index
    %c0_16 = arith.constant 0 : index
    %23 = vector.load %arg2[%c2, %c0_15, %c0_16] : memref<5x128x128xbf16, #tpu.memory_space<vmem>>, vector<1x128x128xbf16>
    %24 = vector.shape_cast %23 : vector<1x128x128xbf16> to vector<128x128xbf16>
    %cst_17 = arith.constant dense<0.000000e+00> : vector<8x128xf32>
    %25 = tpu.matmul %22, %24, %cst_17 {dimension_numbers = #tpu.dot_dimension_numbers<[1], [0], [0], [1], [0, 0, 1, 1], [], []>} : vector<8x128xbf16>, vector<128x128xbf16>, vector<8x128xf32> -> vector<8x128xf32>
    %c2_18 = arith.constant 2 : index
    %c0_19 = arith.constant 0 : index
    %c0_20 = arith.constant 0 : index
    %26 = vector.load %arg3[%c2_18, %c0_19, %c0_20] : memref<5x1x128xf32, #tpu.memory_space<vmem>>, vector<1x1x128xf32>
    %27 = vector.shape_cast %26 : vector<1x1x128xf32> to vector<1x128xf32>
    %28 = vector.broadcast %27 : vector<1x128xf32> to vector<8x128xf32>
    %29 = arith.addf %25, %28 : vector<8x128xf32>
    %cst_21 = arith.constant 0.000000e+00 : f32
    %30 = vector.broadcast %cst_21 : f32 to vector<8x128xf32>
    %31 = arith.maximumf %29, %30 : vector<8x128xf32>
    %32 = arith.truncf %31 : vector<8x128xf32> to vector<8x128xbf16>
    %c3 = arith.constant 3 : index
    %c0_22 = arith.constant 0 : index
    %c0_23 = arith.constant 0 : index
    %33 = vector.load %arg2[%c3, %c0_22, %c0_23] : memref<5x128x128xbf16, #tpu.memory_space<vmem>>, vector<1x128x128xbf16>
    %34 = vector.shape_cast %33 : vector<1x128x128xbf16> to vector<128x128xbf16>
    %cst_24 = arith.constant dense<0.000000e+00> : vector<8x128xf32>
    %35 = tpu.matmul %32, %34, %cst_24 {dimension_numbers = #tpu.dot_dimension_numbers<[1], [0], [0], [1], [0, 0, 1, 1], [], []>} : vector<8x128xbf16>, vector<128x128xbf16>, vector<8x128xf32> -> vector<8x128xf32>
    %c3_25 = arith.constant 3 : index
    %c0_26 = arith.constant 0 : index
    %c0_27 = arith.constant 0 : index
    %36 = vector.load %arg3[%c3_25, %c0_26, %c0_27] : memref<5x1x128xf32, #tpu.memory_space<vmem>>, vector<1x1x128xf32>
    %37 = vector.shape_cast %36 : vector<1x1x128xf32> to vector<1x128xf32>
    %38 = vector.broadcast %37 : vector<1x128xf32> to vector<8x128xf32>
    %39 = arith.addf %35, %38 : vector<8x128xf32>
    %cst_28 = arith.constant 0.000000e+00 : f32
    %40 = vector.broadcast %cst_28 : f32 to vector<8x128xf32>
    %41 = arith.maximumf %39, %40 : vector<8x128xf32>
    %42 = arith.truncf %41 : vector<8x128xf32> to vector<8x128xbf16>
    %c4 = arith.constant 4 : index
    %c0_29 = arith.constant 0 : index
    %c0_30 = arith.constant 0 : index
    %43 = vector.load %arg2[%c4, %c0_29, %c0_30] : memref<5x128x128xbf16, #tpu.memory_space<vmem>>, vector<1x128x128xbf16>
    %44 = vector.shape_cast %43 : vector<1x128x128xbf16> to vector<128x128xbf16>
    %cst_31 = arith.constant dense<0.000000e+00> : vector<8x128xf32>
    %45 = tpu.matmul %42, %44, %cst_31 {dimension_numbers = #tpu.dot_dimension_numbers<[1], [0], [0], [1], [0, 0, 1, 1], [], []>} : vector<8x128xbf16>, vector<128x128xbf16>, vector<8x128xf32> -> vector<8x128xf32>
    %c4_32 = arith.constant 4 : index
    %c0_33 = arith.constant 0 : index
    %c0_34 = arith.constant 0 : index
    %46 = vector.load %arg3[%c4_32, %c0_33, %c0_34] : memref<5x1x128xf32, #tpu.memory_space<vmem>>, vector<1x1x128xf32>
    %47 = vector.shape_cast %46 : vector<1x1x128xf32> to vector<1x128xf32>
    %48 = vector.broadcast %47 : vector<1x128xf32> to vector<8x128xf32>
    %49 = arith.addf %45, %48 : vector<8x128xf32>
    %c0_35 = arith.constant 0 : index
    %c0_36 = arith.constant 0 : index
    %50 = vector.load %arg4[%c0_35, %c0_36] : memref<8x128xf32, #tpu.memory_space<vmem>>, vector<8x128xf32>
    tpu.vector_store %arg4[%c0_35, %c0_36], %49 {strides = array<i32>} : memref<8x128xf32, #tpu.memory_space<vmem>>, vector<8x128xf32>,
    return
  }
  func.func @transform_0(%arg0: i32) -> (i32, i32) {
    %c0_i32 = arith.constant 0 : i32
    %c0_i32_0 = arith.constant 0 : i32
    return %arg0, %c0_i32 : i32, i32
  }
  func.func @transform_1(%arg0: i32) -> (i32, i32, i32) {
    %c0_i32 = arith.constant 0 : i32
    %c0_i32_0 = arith.constant 0 : i32
    %c0_i32_1 = arith.constant 0 : i32
    %c0_i32_2 = arith.constant 0 : i32
    return %c0_i32, %c0_i32_0, %c0_i32_1 : i32, i32, i32
  }
  func.func @transform_2(%arg0: i32) -> (i32, i32, i32) {
    %c0_i32 = arith.constant 0 : i32
    %c0_i32_0 = arith.constant 0 : i32
    %c0_i32_1 = arith.constant 0 : i32
    %c0_i32_2 = arith.constant 0 : i32
    return %c0_i32, %c0_i32_0, %c0_i32_1 : i32, i32, i32
  }
  func.func @transform_3(%arg0: i32) -> (i32, i32) {
    %c0_i32 = arith.constant 0 : i32
    %c0_i32_0 = arith.constant 0 : i32
    return %arg0, %c0_i32 : i32, i32
  }
}

</mosaic_0001>

<llo_original>
// kernel: five_layer_nn.1
$region0: #{five_layer_nn.1}
  #allocation0 [shape = 'u32[]', space=smem, size = 0x4, offset = 0x4, fixed_abs, tag = 'smem constant byte address 0x4 - core index']
  #allocation1 [shape = 'u32[72,128]{1,0:T(1,128)}', space=vmem, size = 0x9000, scoped, tag = 'internal scratch']
  %s0 = inlined_call_operand.hbm [shape: f32[8,32], index: 0, kind: input, shape index: {}]
  %s1 = inlined_call_operand.hbm [shape: bf16[5,128,128], index: 1, kind: input, shape index: {}]
  %s2 = inlined_call_operand.hbm [shape: f32[5,1,128], index: 2, kind: input, shape index: {}]
  %s3 = inlined_call_operand.vmem [shape: f32[8,128], index: 3, kind: output, shape index: {}]
  %s4 = sld [smem:[#allocation0]]
  $region34: #{five_layer_nn.1} parent=0
    _
  %s6 = ssub.s32 1, %s4
  %s7 = scalar_select 0, %s6, %s4
  $region1: #{five_layer_nn.1} parent=0
    #allocation2 [shape = 'u8[4096]{0}', space=vmem, size = 0x1000, scoped, tag = 'input window, operand 0, single buffered']
    #allocation3 [shape = 's32[1]{0}', space=sflag, size = 0x4, scoped, tag = 'scoped memory for five_layer_nn.1']
    #allocation4 [shape = 'u8[163840]{0}', space=vmem, size = 0x28000, scoped, tag = 'input window, operand 1, single buffered']
    #allocation5 [shape = 's32[1]{0}', space=sflag, size = 0x4, scoped, tag = 'scoped memory for five_layer_nn.1']
    #allocation6 [shape = 'u8[2560]{0}', space=vmem, size = 0xc00, scoped, tag = 'input window, operand 2, single buffered']
    %8 = vsyncpa [#allocation3], 0
    %9 = vsyncpa [#allocation5], 0
    // Predicated region
    $region2: #{five_layer_nn.1} parent=1 // pred_check
      _
    $region3: #{five_layer_nn.1} parent=1 // pred_check_branch
      %11 = sbr.rel (0) target = $region5
    $region4: #{five_layer_nn.1} parent=1 // pred_region
      %13 = vsyncadd [#allocation3], 0
      %s15 = sshll.u32 %s0, 4
      %s16 = int_to_ptr.hbm [resolvable:$true] %s15
      %s17 = sshll.u32 [#allocation2], 4
      %s18 = int_to_ptr.vmem [resolvable:$true] %s17
      %20 = dma.hbm_to_vmem [thread:$0]  %s16, 128, %s18, [#allocation3]
    $region5: #{five_layer_nn.1} parent=1 // pred_fallthru
      _
    // Predicated region
    $region6: #{five_layer_nn.1} parent=1 // pred_check
      _
    $region7: #{five_layer_nn.1} parent=1 // pred_check_branch
      %22 = sbr.rel (0) target = $region9
    $region8: #{five_layer_nn.1} parent=1 // pred_region
      %24 = vsyncadd [#allocation5], 0
      %s25 = sshll.u32 %s1, 4
      %s26 = int_to_ptr.hbm [resolvable:$true] %s25
      %s27 = sshll.u32 [#allocation4], 4
      %s28 = int_to_ptr.vmem [resolvable:$true] %s27
      %33 = dma.hbm_to_vmem [thread:$0]  %s26, 5120, %s28, [#allocation5], 64, 64, 4
    $region9: #{five_layer_nn.1} parent=1 // pred_fallthru
      _
    // Predicated region
    $region10: #{five_layer_nn.1} parent=1 // pred_check
      _
    $region11: #{five_layer_nn.1} parent=1 // pred_check_branch
      %35 = sbr.rel (0) target = $region13
    $region12: #{five_layer_nn.1} parent=1 // pred_region
      %37 = vsyncadd [#allocation5], 0
      %s38 = sshll.u32 %s2, 4
      %s39 = int_to_ptr.hbm [resolvable:$true] %s38
      %s40 = sshll.u32 [#allocation6], 4
      %s41 = int_to_ptr.vmem [resolvable:$true] %s40
      %46 = dma.hbm_to_vmem [thread:$0]  %s39, 80, %s41, [#allocation5], 16, 16, 1
    $region13: #{five_layer_nn.1} parent=1 // pred_fallthru
      _
    // Predicated region
    $region14: #{five_layer_nn.1} parent=1 // pred_check
      _
    $region15: #{five_layer_nn.1} parent=1 // pred_check_branch
      %48 = sbr.rel (0) target = $region17
    $region16: #{five_layer_nn.1} parent=1 // pred_region
      %50 = dma.done [#allocation3], 128
    $region17: #{five_layer_nn.1} parent=1 // pred_fallthru
      _
    // Predicated region
    $region18: #{five_layer_nn.1} parent=1 // pred_check
      _
    $region19: #{five_layer_nn.1} parent=1 // pred_check_branch
      %52 = sbr.rel (0) target = $region21
    $region20: #{five_layer_nn.1} parent=1 // pred_region
      %54 = dma.done [#allocation5], 5120
    $region21: #{five_layer_nn.1} parent=1 // pred_fallthru
      _
    // Predicated region
    $region22: #{five_layer_nn.1} parent=1 // pred_check
      _
    $region23: #{five_layer_nn.1} parent=1 // pred_check_branch
      %56 = sbr.rel (0) target = $region25
    $region24: #{five_layer_nn.1} parent=1 // pred_region
      %58 = dma.done [#allocation5], 80
    $region25: #{five_layer_nn.1} parent=1 // pred_fallthru
      _
    %v60 = vld [vmem:[#allocation2] sm:$0xff]
    %v61 = vld [vmem:[#allocation4] sm:$0xf]
    %v62 = vld [vmem:[#allocation4 + $0x4] sm:$0xf]
    %v63 = vld [vmem:[#allocation4 + $0x8] sm:$0xf]
    %v64 = vld [vmem:[#allocation4 + $0xc] sm:$0xf]
    %v65 = vpack.c.bf16 %v60, %v60
    %v66 = vld [vmem:[#allocation6] sm:$0x1]
    %v68 = vperm.slane %v66, 0
    %v74 = vunpack.c.l.b16 %v61
    %v75 = vunpack.c.l.b16 %v62
    %v76 = vunpack.c.l.b16 %v63
    %v77 = vunpack.c.l.b16 %v64
    %v78 = vpack.c.b16 %v75, %v74
    %v79 = vpack.c.b16 %v77, %v76
    %vm82 = vcmask 261120
    %v84 = vsel %vm82, %v65, 0
    %86 = vmatpush.bf16.msra.mxu0 0
    %87 = vmatpush.bf16.msra.mxu0 0
    %88 = vmatpush.bf16.msra.mxu0 0
    %89 = vmatpush.bf16.msra.mxu0 0
    %90 = vmatpush.bf16.msra.mxu0 0
    %91 = vmatpush.bf16.msra.mxu0 0
    %92 = vmatpush.bf16.msra.mxu0 %v79
    %93 = vmatpush.bf16.msra.mxu0 %v78
    %94 = vmatmul.bf16.gmra.mxu0 %v84
    %v95 = vpop.f32.mrf.mxu0
    %v96 = vadd.f32 %v68, %v95
    %v97 = vpop.f32.mrf.mxu0
    %98 = vdwg.mxu0
    %v99 = vmax.f32 %v96, 0.0
    %v100 = vpack.c.bf16 %v99, %v99
    %s101 = scalar_lea.vmem [#allocation4], 64
    %v102 = vld [vmem:[%s101] sm:$0xf]
    %v103 = vld [vmem:[%s101 + $0x4] sm:$0xf]
    %v104 = vld [vmem:[%s101 + $0x8] sm:$0xf]
    %v105 = vld [vmem:[%s101 + $0xc] sm:$0xf]
    %v106 = vld [vmem:[%s101 + $0x10] sm:$0xf]
    %v107 = vld [vmem:[%s101 + $0x14] sm:$0xf]
    %v108 = vld [vmem:[%s101 + $0x18] sm:$0xf]
    %v109 = vld [vmem:[%s101 + $0x1c] sm:$0xf]
    %v110 = vld [vmem:[%s101 + $0x20] sm:$0xf]
    %v111 = vld [vmem:[%s101 + $0x24] sm:$0xf]
    %v112 = vld [vmem:[%s101 + $0x28] sm:$0xf]
    %v113 = vld [vmem:[%s101 + $0x2c] sm:$0xf]
    %v114 = vld [vmem:[%s101 + $0x30] sm:$0xf]
    %v115 = vld [vmem:[%s101 + $0x34] sm:$0xf]
    %v116 = vld [vmem:[%s101 + $0x38] sm:$0xf]
    %v117 = vld [vmem:[%s101 + $0x3c] sm:$0xf]
    %s118 = scalar_lea.vmem [#allocation6], 1
    %v119 = vld [vmem:[%s118] sm:$0x1]
    %v121 = vperm.slane %v119, 0
    %v139 = vunpack.c.l.b16 %v102
    %v140 = vunpack.c.l.b16 %v103
    %v141 = vunpack.c.l.b16 %v104
    %v142 = vunpack.c.l.b16 %v105
    %v143 = vunpack.c.l.b16 %v106
    %v144 = vunpack.c.l.b16 %v107
    %v145 = vunpack.c.l.b16 %v108
    %v146 = vunpack.c.l.b16 %v109
    %v147 = vunpack.c.l.b16 %v110
    %v148 = vunpack.c.l.b16 %v111
    %v149 = vunpack.c.l.b16 %v112
    %v150 = vunpack.c.l.b16 %v113
    %v151 = vunpack.c.l.b16 %v114
    %v152 = vunpack.c.l.b16 %v115
    %v153 = vunpack.c.l.b16 %v116
    %v154 = vunpack.c.l.b16 %v117
    %v155 = vpack.c.b16 %v140, %v139
    %v156 = vpack.c.b16 %v142, %v141
    %v157 = vpack.c.b16 %v144, %v143
    %v158 = vpack.c.b16 %v146, %v145
    %v159 = vpack.c.b16 %v148, %v147
    %v160 = vpack.c.b16 %v150, %v149
    %v161 = vpack.c.b16 %v152, %v151
    %v162 = vpack.c.b16 %v154, %v153
    %171 = vmatpush.bf16.msra.mxu0 %v162
    %172 = vmatpush.bf16.msra.mxu0 %v161
    %173 = vmatpush.bf16.msra.mxu0 %v160
    %174 = vmatpush.bf16.msra.mxu0 %v159
    %175 = vmatpush.bf16.msra.mxu0 %v158
    %176 = vmatpush.bf16.msra.mxu0 %v157
    %177 = vmatpush.bf16.msra.mxu0 %v156
    %178 = vmatpush.bf16.msra.mxu0 %v155
    %179 = vmatmul.bf16.gmra.mxu0 %v100
    %v180 = vpop.f32.mrf.mxu0
    %v181 = vadd.f32 %v121, %v180
    %v182 = vpop.f32.mrf.mxu0
    %183 = vdwg.mxu0
    %v184 = vmax.f32 %v181, 0.0
    %v185 = vpack.c.bf16 %v184, %v184
    %s186 = scalar_lea.vmem [#allocation4], 128
    %v187 = vld [vmem:[%s186] sm:$0xf]
    %v188 = vld [vmem:[%s186 + $0x4] sm:$0xf]
    %v189 = vld [vmem:[%s186 + $0x8] sm:$0xf]
    %v190 = vld [vmem:[%s186 + $0xc] sm:$0xf]
    %v191 = vld [vmem:[%s186 + $0x10] sm:$0xf]
    %v192 = vld [vmem:[%s186 + $0x14] sm:$0xf]
    %v193 = vld [vmem:[%s186 + $0x18] sm:$0xf]
    %v194 = vld [vmem:[%s186 + $0x1c] sm:$0xf]
    %v195 = vld [vmem:[%s186 + $0x20] sm:$0xf]
    %v196 = vld [vmem:[%s186 + $0x24] sm:$0xf]
    %v197 = vld [vmem:[%s186 + $0x28] sm:$0xf]
    %v198 = vld [vmem:[%s186 + $0x2c] sm:$0xf]
    %v199 = vld [vmem:[%s186 + $0x30] sm:$0xf]
    %v200 = vld [vmem:[%s186 + $0x34] sm:$0xf]
    %v201 = vld [vmem:[%s186 + $0x38] sm:$0xf]
    %v202 = vld [vmem:[%s186 + $0x3c] sm:$0xf]
    %s203 = scalar_lea.vmem [#allocation6], 2
    %v204 = vld [vmem:[%s203] sm:$0x1]
    %v206 = vperm.slane %v204, 0
    %v224 = vunpack.c.l.b16 %v187
    %v225 = vunpack.c.l.b16 %v188
    %v226 = vunpack.c.l.b16 %v189
    %v227 = vunpack.c.l.b16 %v190
    %v228 = vunpack.c.l.b16 %v191
    %v229 = vunpack.c.l.b16 %v192
    %v230 = vunpack.c.l.b16 %v193
    %v231 = vunpack.c.l.b16 %v194
    %v232 = vunpack.c.l.b16 %v195
    %v233 = vunpack.c.l.b16 %v196
    %v234 = vunpack.c.l.b16 %v197
    %v235 = vunpack.c.l.b16 %v198
    %v236 = vunpack.c.l.b16 %v199
    %v237 = vunpack.c.l.b16 %v200
    %v238 = vunpack.c.l.b16 %v201
    %v239 = vunpack.c.l.b16 %v202
    %v240 = vpack.c.b16 %v225, %v224
    %v241 = vpack.c.b16 %v227, %v226
    %v242 = vpack.c.b16 %v229, %v228
    %v243 = vpack.c.b16 %v231, %v230
    %v244 = vpack.c.b16 %v233, %v232
    %v245 = vpack.c.b16 %v235, %v234
    %v246 = vpack.c.b16 %v237, %v236
    %v247 = vpack.c.b16 %v239, %v238
    %256 = vmatpush.bf16.msra.mxu0 %v247
    %257 = vmatpush.bf16.msra.mxu0 %v246
    %258 = vmatpush.bf16.msra.mxu0 %v245
    %259 = vmatpush.bf16.msra.mxu0 %v244
    %260 = vmatpush.bf16.msra.mxu0 %v243
    %261 = vmatpush.bf16.msra.mxu0 %v242
    %262 = vmatpush.bf16.msra.mxu0 %v241
    %263 = vmatpush.bf16.msra.mxu0 %v240
    %264 = vmatmul.bf16.gmra.mxu0 %v185
    %v265 = vpop.f32.mrf.mxu0
    %v266 = vadd.f32 %v206, %v265
    %v267 = vpop.f32.mrf.mxu0
    %268 = vdwg.mxu0
    %v269 = vmax.f32 %v266, 0.0
    %v270 = vpack.c.bf16 %v269, %v269
    %s271 = scalar_lea.vmem [#allocation4], 192
    %v272 = vld [vmem:[%s271] sm:$0xf]
    %v273 = vld [vmem:[%s271 + $0x4] sm:$0xf]
    %v274 = vld [vmem:[%s271 + $0x8] sm:$0xf]
    %v275 = vld [vmem:[%s271 + $0xc] sm:$0xf]
    %v276 = vld [vmem:[%s271 + $0x10] sm:$0xf]
    %v277 = vld [vmem:[%s271 + $0x14] sm:$0xf]
    %v278 = vld [vmem:[%s271 + $0x18] sm:$0xf]
    %v279 = vld [vmem:[%s271 + $0x1c] sm:$0xf]
    %v280 = vld [vmem:[%s271 + $0x20] sm:$0xf]
    %v281 = vld [vmem:[%s271 + $0x24] sm:$0xf]
    %v282 = vld [vmem:[%s271 + $0x28] sm:$0xf]
    %v283 = vld [vmem:[%s271 + $0x2c] sm:$0xf]
    %v284 = vld [vmem:[%s271 + $0x30] sm:$0xf]
    %v285 = vld [vmem:[%s271 + $0x34] sm:$0xf]
    %v286 = vld [vmem:[%s271 + $0x38] sm:$0xf]
    %v287 = vld [vmem:[%s271 + $0x3c] sm:$0xf]
    %s288 = scalar_lea.vmem [#allocation6], 3
    %v289 = vld [vmem:[%s288] sm:$0x1]
    %v291 = vperm.slane %v289, 0
    %v309 = vunpack.c.l.b16 %v272
    %v310 = vunpack.c.l.b16 %v273
    %v311 = vunpack.c.l.b16 %v274
    %v312 = vunpack.c.l.b16 %v275
    %v313 = vunpack.c.l.b16 %v276
    %v314 = vunpack.c.l.b16 %v277
    %v315 = vunpack.c.l.b16 %v278
    %v316 = vunpack.c.l.b16 %v279
    %v317 = vunpack.c.l.b16 %v280
    %v318 = vunpack.c.l.b16 %v281
    %v319 = vunpack.c.l.b16 %v282
    %v320 = vunpack.c.l.b16 %v283
    %v321 = vunpack.c.l.b16 %v284
    %v322 = vunpack.c.l.b16 %v285
    %v323 = vunpack.c.l.b16 %v286
    %v324 = vunpack.c.l.b16 %v287
    %v325 = vpack.c.b16 %v310, %v309
    %v326 = vpack.c.b16 %v312, %v311
    %v327 = vpack.c.b16 %v314, %v313
    %v328 = vpack.c.b16 %v316, %v315
    %v329 = vpack.c.b16 %v318, %v317
    %v330 = vpack.c.b16 %v320, %v319
    %v331 = vpack.c.b16 %v322, %v321
    %v332 = vpack.c.b16 %v324, %v323
    %341 = vmatpush.bf16.msra.mxu0 %v332
    %342 = vmatpush.bf16.msra.mxu0 %v331
    %343 = vmatpush.bf16.msra.mxu0 %v330
    %344 = vmatpush.bf16.msra.mxu0 %v329
    %345 = vmatpush.bf16.msra.mxu0 %v328
    %346 = vmatpush.bf16.msra.mxu0 %v327
    %347 = vmatpush.bf16.msra.mxu0 %v326
    %348 = vmatpush.bf16.msra.mxu0 %v325
    %349 = vmatmul.bf16.gmra.mxu0 %v270
    %v350 = vpop.f32.mrf.mxu0
    %v351 = vadd.f32 %v291, %v350
    %v352 = vpop.f32.mrf.mxu0
    %353 = vdwg.mxu0
    %v354 = vmax.f32 %v351, 0.0
    %v355 = vpack.c.bf16 %v354, %v354
    %s356 = scalar_lea.vmem [#allocation4], 256
    %v357 = vld [vmem:[%s356] sm:$0xf]
    %v358 = vld [vmem:[%s356 + $0x4] sm:$0xf]
    %v359 = vld [vmem:[%s356 + $0x8] sm:$0xf]
    %v360 = vld [vmem:[%s356 + $0xc] sm:$0xf]
    %v361 = vld [vmem:[%s356 + $0x10] sm:$0xf]
    %v362 = vld [vmem:[%s356 + $0x14] sm:$0xf]
    %v363 = vld [vmem:[%s356 + $0x18] sm:$0xf]
    %v364 = vld [vmem:[%s356 + $0x1c] sm:$0xf]
    %v365 = vld [vmem:[%s356 + $0x20] sm:$0xf]
    %v366 = vld [vmem:[%s356 + $0x24] sm:$0xf]
    %v367 = vld [vmem:[%s356 + $0x28] sm:$0xf]
    %v368 = vld [vmem:[%s356 + $0x2c] sm:$0xf]
    %v369 = vld [vmem:[%s356 + $0x30] sm:$0xf]
    %v370 = vld [vmem:[%s356 + $0x34] sm:$0xf]
    %v371 = vld [vmem:[%s356 + $0x38] sm:$0xf]
    %v372 = vld [vmem:[%s356 + $0x3c] sm:$0xf]
    %s373 = scalar_lea.vmem [#allocation6], 4
    %v374 = vld [vmem:[%s373] sm:$0x1]
    %v376 = vperm.slane %v374, 0
    %v394 = vunpack.c.l.b16 %v357
    %v395 = vunpack.c.l.b16 %v358
    %v396 = vunpack.c.l.b16 %v359
    %v397 = vunpack.c.l.b16 %v360
    %v398 = vunpack.c.l.b16 %v361
    %v399 = vunpack.c.l.b16 %v362
    %v400 = vunpack.c.l.b16 %v363
    %v401 = vunpack.c.l.b16 %v364
    %v402 = vunpack.c.l.b16 %v365
    %v403 = vunpack.c.l.b16 %v366
    %v404 = vunpack.c.l.b16 %v367
    %v405 = vunpack.c.l.b16 %v368
    %v406 = vunpack.c.l.b16 %v369
    %v407 = vunpack.c.l.b16 %v370
    %v408 = vunpack.c.l.b16 %v371
    %v409 = vunpack.c.l.b16 %v372
    %v410 = vpack.c.b16 %v395, %v394
    %v411 = vpack.c.b16 %v397, %v396
    %v412 = vpack.c.b16 %v399, %v398
    %v413 = vpack.c.b16 %v401, %v400
    %v414 = vpack.c.b16 %v403, %v402
    %v415 = vpack.c.b16 %v405, %v404
    %v416 = vpack.c.b16 %v407, %v406
    %v417 = vpack.c.b16 %v409, %v408
    %426 = vmatpush.bf16.msra.mxu0 %v417
    %427 = vmatpush.bf16.msra.mxu0 %v416
    %428 = vmatpush.bf16.msra.mxu0 %v415
    %429 = vmatpush.bf16.msra.mxu0 %v414
    %430 = vmatpush.bf16.msra.mxu0 %v413
    %431 = vmatpush.bf16.msra.mxu0 %v412
    %432 = vmatpush.bf16.msra.mxu0 %v411
    %433 = vmatpush.bf16.msra.mxu0 %v410
    %434 = vmatmul.bf16.gmra.mxu0 %v355
    %v435 = vpop.f32.mrf.mxu0
    %v436 = vadd.f32 %v376, %v435
    %v437 = vpop.f32.mrf.mxu0
    %438 = vdwg.mxu0
    %439 = vst [vmem:[%s3] sm:$0xff] %v436
    // Predicated region
    $region26: #{five_layer_nn.1} parent=1 // pred_check
      _
    $region27: #{five_layer_nn.1} parent=1 // pred_check_branch
      %441 = sbr.rel (0) target = $region29
    $region28: #{five_layer_nn.1} parent=1 // pred_region
      _
    $region29: #{five_layer_nn.1} parent=1 // pred_fallthru
      _
    // Predicated region
    $region30: #{five_layer_nn.1} parent=1 // pred_check
      _
    $region31: #{five_layer_nn.1} parent=1 // pred_check_branch
      %443 = sbr.rel (0) target = $region33
    $region32: #{five_layer_nn.1} parent=1 // pred_region
      _
    $region33: #{five_layer_nn.1} parent=1 // pred_fallthru
      _
    %444 = vsyncpa [#allocation3], 1
    %445 = vsyncpa [#allocation5], 1

</llo_original>
